<compile_context>
chip_gen: v5e
topology: v5e:2x2
jax: 0.10.0
libtpu: 0.0.40
codegen_flags: <defaults>
</compile_context>

<pallas_src>
import functools

import jax
import jax.numpy as jnp
from jax import lax
from jax.experimental import pallas as pl
from jax.experimental.pallas import tpu as pltpu


def _round_up(x, m):
    return ((x + m - 1) // m) * m


def _cdiv(a, b):
    return -(-a // b)


# ---------------------------------------------------------------------------
# Kernels: 2-D grid = (row tiles ["parallel"], hidden tiles ["arbitrary"]).
# x / x_cent / recon-accumulator blocks are resident across the hidden axis;
# only the weight tiles stream from HBM.
# ---------------------------------------------------------------------------

def _neuron_kernel_untied(x_ref, w_enc_ref, b_enc_ref, w_dec_ref, b_dec_ref,
                          recon_ref, acts_ref, xc_ref, acc_ref):
    h = pl.program_id(1)

    @pl.when(h == 0)
    def _():
        # Hoist (x - b_dec) out of the hidden loop; keep it in the input dtype
        # so the MXU sees native (e.g. bf16) operands.
        xc_ref[...] = x_ref[...] - b_dec_ref[...]
        acc_ref[...] = jnp.zeros_like(acc_ref)

    # Encoder: acts = relu(x_cent @ W_enc_tile + b_enc_tile), f32 accumulation.
    acts = jnp.dot(xc_ref[...], w_enc_ref[...],
                   preferred_element_type=jnp.float32)
    acts = jnp.maximum(acts + b_enc_ref[...].astype(jnp.float32), 0.0)
    acts_ref[...] = acts.astype(acts_ref.dtype)

    # Decoder: recon accumulator += acts_tile @ W_dec_tile (native-dtype MXU
    # operands, f32 accumulation).
    acc_ref[...] += jnp.dot(acts.astype(w_dec_ref.dtype), w_dec_ref[...],
                            preferred_element_type=jnp.float32)

    @pl.when(h == pl.num_programs(1) - 1)
    def _():
        recon_ref[...] = (acc_ref[...]
                          + b_dec_ref[...].astype(jnp.float32)
                          ).astype(recon_ref.dtype)


def _neuron_kernel_tied(x_ref, b_enc_ref, w_dec_ref, b_dec_ref,
                        recon_ref, acts_ref, xc_ref, acc_ref):
    h = pl.program_id(1)

    @pl.when(h == 0)
    def _():
        xc_ref[...] = x_ref[...] - b_dec_ref[...]
        acc_ref[...] = jnp.zeros_like(acc_ref)

    w_dec = w_dec_ref[...]
    # Encoder contracts the last axis of both operands ('nt' matmul):
    #   x_cent [tm, d_out] x W_dec_tile [th, d_out] -> [tm, th]
    # so W_dec.T is never materialized and the same tile feeds the decoder.
    acts = lax.dot_general(xc_ref[...], w_dec, (((1,), (1,)), ((), ())),
                           preferred_element_type=jnp.float32)
    acts = jnp.maximum(acts + b_enc_ref[...].astype(jnp.float32), 0.0)
    acts_ref[...] = acts.astype(acts_ref.dtype)

    acc_ref[...] += jnp.dot(acts.astype(w_dec.dtype), w_dec,
                            preferred_element_type=jnp.float32)

    @pl.when(h == pl.num_programs(1) - 1)
    def _():
        recon_ref[...] = (acc_ref[...]
                          + b_dec_ref[...].astype(jnp.float32)
                          ).astype(recon_ref.dtype)


# ---------------------------------------------------------------------------
# Tile selection (runs at Python level, outside jit).
# ---------------------------------------------------------------------------

def _vmem_capacity_bytes():
    default = 64 * 1024 * 1024           # conservative (v7x per-TC VMEM)
    try:
        info = pltpu.get_tpu_info()
    except Exception:
        return default
    for name in ("vmem_capacity_bytes", "vmem_size_bytes", "vmem_bytes"):
        v = getattr(info, name, None)
        if isinstance(v, int) and v > 0:
            return v
    return default


def _working_set_bytes(tm, th, d_out, itemsize, tied):
    """Conservative VMEM working-set estimate (double-buffered blocks)."""
    n_w = 1 if tied else 2
    b = 2 * tm * d_out * itemsize              # x input block
    b += 2 * n_w * th * d_out * itemsize       # weight tile(s)
    b += 2 * th * itemsize                     # b_enc tile
    b += 2 * d_out * itemsize                  # b_dec
    b += 2 * tm * d_out * itemsize             # recon output block
    b += 2 * tm * th * itemsize                # acts output block
    b += tm * d_out * itemsize                 # x_cent scratch
    b += tm * d_out * 4                        # f32 recon accumulator
    return b


def _choose_tiles(n, d_out, d_hidden, itemsize, tied, tm=None, th=None):
    sub = max(8, 32 // itemsize)               # 8 f32 / 16 bf16 / 32 int8
    budget = int(_vmem_capacity_bytes() * 0.7)
    h_full = _round_up(max(d_hidden, 1), 128)

    # Target >= 2 row tiles when there is enough work (feeds both v7x
    # TensorCores); keep row tiles at <= ~1024 rows with minimal padding.
    min_row_tiles = 2 if n >= 2 * sub else 1
    n_row_tiles = max(min_row_tiles, _cdiv(max(n, 1), 1024))
    tm_cap = max(sub, _round_up(_cdiv(max(n, 1), n_row_tiles), sub))

    def largest_tm_that_fits(th_c):
        t = tm_cap
        while t > sub and _working_set_bytes(t, th_c, d_out, itemsize, tied) > budget:
            t -= sub
        if _working_set_bytes(t, th_c, d_out, itemsize, tied) > budget:
            return None
        return t

    if tm is None or th is None:
        auto_tm = auto_th = None
        # Prefer collapsing the hidden grid: weight index maps become constant,
        # weights stay VMEM-resident across row tiles (one HBM read per call).
        t = largest_tm_that_fits(h_full)
        if t is not None and t >= min(tm_cap, 64):
            auto_tm, auto_th = t, h_full
        else:
            best = None
            for th_c in (512, 256, 128):
                if th_c > h_full:
                    continue
                t = largest_tm_that_fits(th_c)
                if t is None:
                    continue
                key = (t, th_c)              # maximize tm, then th
                if best is None or key > best:
                    best = key
            if best is None:
                best = (sub, 128)
            auto_tm, auto_th = best
        tm = tm if tm is not None else auto_tm
        th = th if th is not None else auto_th

    tm = max(sub, _round_up(min(tm, _round_up(max(n, 1), sub)), sub))
    th = max(128, _round_up(min(th, h_full), 128))
    return tm, th


# ---------------------------------------------------------------------------
# pallas_call wrapper
# ---------------------------------------------------------------------------

@functools.partial(jax.jit, static_argnames=("tied", "tm", "th", "vmem_limit"))
def _neuron_forward_impl(x, w_enc, b_enc, w_dec, b_dec, *, tied, tm, th,
                         vmem_limit):
    n, d_out = x.shape
    d_hidden = w_dec.shape[0]
    itemsize = jnp.dtype(x.dtype).itemsize

    n_pad = _round_up(max(n, 1), tm)
    h_pad = _round_up(d_hidden, th)
    dh = h_pad - d_hidden

    # NOTE: in a real training step pre-pad the (static) parameters once
    # outside the step so these pads are not re-executed every call.
    xp = x if n_pad == n else jnp.pad(x, ((0, n_pad - n), (0, 0)))
    w_dec_p = w_dec if dh == 0 else jnp.pad(w_dec, ((0, dh), (0, 0)))
    b_enc_p = b_enc if dh == 0 else jnp.pad(b_enc, ((0, dh),))
    b_enc2 = b_enc_p.reshape(1, h_pad)
    b_dec2 = b_dec.reshape(1, d_out)

    grid = (n_pad // tm, h_pad // th)
    row_tiles, h_tiles = grid

    x_spec = pl.BlockSpec((tm, d_out), lambda i, h: (i, 0))
    b_enc_spec = pl.BlockSpec((1, th), lambda i, h: (0, h))
    w_dec_spec = pl.BlockSpec((th, d_out), lambda i, h: (h, 0))
    b_dec_spec = pl.BlockSpec((1, d_out), lambda i, h: (0, 0))
    recon_spec = pl.BlockSpec((tm, d_out), lambda i, h: (i, 0))
    acts_spec = pl.BlockSpec((tm, th), lambda i, h: (i, h))

    n_w = 1 if tied else 2
    weight_reads = 1 if h_tiles == 1 else row_tiles   # real re-streaming
    flops = 4 * n_pad * d_out * h_pad                 # two matmuls, 2 flop/MAC
    bytes_accessed = itemsize * (
        n_pad * d_out * 2                             # x in + recon out
        + n_pad * h_pad                               # acts out
        + (h_pad * d_out * n_w + h_pad) * weight_reads  # weights + b_enc
        + d_out)                                      # b_dec

    if tied:
        kernel = _neuron_kernel_tied
        in_specs = [x_spec, b_enc_spec, w_dec_spec, b_dec_spec]
        operands = (xp, b_enc2, w_dec_p, b_dec2)
    else:
        w_enc_p = w_enc if dh == 0 else jnp.pad(w_enc, ((0, 0), (0, dh)))
        kernel = _neuron_kernel_untied
        in_specs = [x_spec,
                    pl.BlockSpec((d_out, th), lambda i, h: (0, h)),
                    b_enc_spec, w_dec_spec, b_dec_spec]
        operands = (xp, w_enc_p, b_enc2, w_dec_p, b_dec2)

    recon, acts = pl.pallas_call(
        kernel,
        out_shape=(
            jax.ShapeDtypeStruct((n_pad, d_out), x.dtype),
            jax.ShapeDtypeStruct((n_pad, h_pad), x.dtype),
        ),
        grid_spec=pltpu.PrefetchScalarGridSpec(
            num_scalar_prefetch=0,
            grid=grid,
            in_specs=in_specs,
            out_specs=[recon_spec, acts_spec],
            scratch_shapes=[
                pltpu.VMEM((tm, d_out), x.dtype),      # hoisted x - b_dec
                pltpu.VMEM((tm, d_out), jnp.float32),  # f32 recon accumulator
            ],
        ),
        compiler_params=pltpu.CompilerParams(
            dimension_semantics=("parallel", "arbitrary"),
            vmem_limit_bytes=vmem_limit),
        cost_estimate=pl.CostEstimate(
            flops=flops, transcendentals=0, bytes_accessed=bytes_accessed),
    )(*operands)

    # Strip padding.
    if n_pad != n:
        recon = recon[:n]
        acts = acts[:n]
    if h_pad != d_hidden:
        # TODO(synk): choose dict_size as a multiple of 128 (or pre-pad params)
        # to avoid this copy of the full acts array on every call.
        acts = acts[:, :d_hidden]
    return recon, acts


def neuron_forward(x, w_enc, b_enc, w_dec, b_dec, *, tied=False,
                   tm=None, th=None):
    """Returns (x_reconstruct, acts), matching Neuron.forward.

    x: [N, d_out], W_enc: [d_out, d_hidden], W_dec: [d_hidden, d_out].
    In the tied case (cfg['tied_enc_dec'] == 1) w_enc is ignored and W_dec.T
    is used as the encoder without materializing the transpose.
    tm / th override the auto-derived row / hidden tile sizes (for testing).
    """
    n, d_out = x.shape
    d_hidden = w_dec.shape[0]
    itemsize = jnp.dtype(x.dtype).itemsize
    tm_eff, th_eff = _choose_tiles(n, d_out, d_hidden, itemsize, tied, tm, th)
    ws = _working_set_bytes(tm_eff, th_eff, d_out, itemsize, tied)
    vmem_limit = int(min(_vmem_capacity_bytes(),
                         max(ws + (4 << 20), 16 << 20)))
    return _neuron_forward_impl(x, w_enc, b_enc, w_dec, b_dec, tied=tied,
                                tm=tm_eff, th=th_eff, vmem_limit=vmem_limit)


def reference_forward(x, w_enc, b_enc, w_dec, b_dec, tied=False):
    w = w_dec.T if tied else w_enc
    acts = jax.nn.relu(jnp.dot(x - b_dec, w,
                               precision=lax.Precision.HIGHEST) + b_enc)
    recon = jnp.dot(acts, w_dec, precision=lax.Precision.HIGHEST) + b_dec
    return recon, acts


if __name__ == "__main__":
    # Small shapes consistent with the module: d_out = d_model, d_hidden = dict_size.
    batch, seq = 2, 7          # -> N = 14 flattened rows (exercises row padding)
    d_out = 128                # d_model
    d_hidden = 192             # dict_size (exercises hidden-axis padding)
    n_rows = batch * seq

    key = jax.random.PRNGKey(0)
    kx, ke, kbe, kd, kbd = jax.random.split(key, 5)
    x = jax.random.normal(kx, (n_rows, d_out), dtype=jnp.float32)
    w_enc = jax.random.normal(ke, (d_out, d_hidden), dtype=jnp.float32) * 0.1
    b_enc = jax.random.normal(kbe, (d_hidden,), dtype=jnp.float32) * 0.1
    w_dec = jax.random.normal(kd, (d_hidden, d_out), dtype=jnp.float32) * 0.1
    b_dec = jax.random.normal(kbd, (d_out,), dtype=jnp.float32) * 0.1

    ok = True

    # f32: auto tiles (collapsed hidden grid) and forced small tiles
    # (exercises multi-row-tile / multi-hidden-tile accumulation paths).
    for tied in (False, True):
        for tiles in (None, (8, 128)):
            kw = {} if tiles is None else {"tm": tiles[0], "th": tiles[1]}
            recon, acts = neuron_forward(x, w_enc, b_enc, w_dec, b_dec,
                                         tied=tied, **kw)
            jax.block_until_ready((recon, acts))
            r_ref, a_ref = reference_forward(x, w_enc, b_enc, w_dec, b_dec,
                                             tied=tied)
            ok &= bool(jnp.allclose(recon, r_ref, atol=1e-3, rtol=1e-3))
            ok &= bool(jnp.allclose(acts, a_ref, atol=1e-3, rtol=1e-3))

    # bf16 smoke test: native bf16 MXU operands with f32 accumulation.
    xb = x.astype(jnp.bfloat16)
    web = w_enc.astype(jnp.bfloat16)
    beb = b_enc.astype(jnp.bfloat16)
    wdb = w_dec.astype(jnp.bfloat16)
    bdb = b_dec.astype(jnp.bfloat16)
    for tied in (False, True):
        recon, acts = neuron_forward(xb, web, beb, wdb, bdb, tied=tied)
        jax.block_until_ready((recon, acts))
        r_ref, a_ref = reference_forward(x, w_enc, b_enc, w_dec, b_dec,
                                         tied=tied)
        ok &= bool(jnp.allclose(recon.astype(jnp.float32), r_ref,
                                atol=0.15, rtol=0.1))
        ok &= bool(jnp.allclose(acts.astype(jnp.float32), a_ref,
                                atol=0.15, rtol=0.1))

    print("KERNEL_OK" if ok else "KERNEL_MISMATCH")
</pallas_src>

<mosaic_0001>
module attributes {stable_mosaic.version = 11 : i64} {
  func.func @_neuron_kernel_untied(%arg0: i32, %arg1: i32, %arg2: memref<16x128xf32, #tpu.memory_space<vmem>>, %arg3: memref<128x256xf32, #tpu.memory_space<vmem>>, %arg4: memref<1x256xf32, #tpu.memory_space<vmem>>, %arg5: memref<256x128xf32, #tpu.memory_space<vmem>>, %arg6: memref<1x128xf32, #tpu.memory_space<vmem>>, %arg7: memref<16x128xf32, #tpu.memory_space<vmem>>, %arg8: memref<16x256xf32, #tpu.memory_space<vmem>>, %arg9: memref<16x128xf32, #tpu.memory_space<vmem>>, %arg10: memref<16x128xf32, #tpu.memory_space<vmem>>) attributes {dimension_semantics = [#tpu.dimension_semantics<parallel>, #tpu.dimension_semantics<arbitrary>], iteration_bounds = array<i64: 1, 1>, scalar_prefetch = 0 : i64, scratch_operands = 2 : i64, tpu.core_type = #tpu.core_type<tc>, window_params = [{transform_indices = @transform_0, window_bounds = array<i64: 16, 128>}, {transform_indices = @transform_1, window_bounds = array<i64: 128, 256>}, {transform_indices = @transform_2, window_bounds = array<i64: 1, 256>}, {transform_indices = @transform_3, window_bounds = array<i64: 256, 128>}, {pipeline_mode = #tpu.pipeline_mode<synchronous>, transform_indices = @transform_4, window_bounds = array<i64: 1, 128>}, {transform_indices = @transform_5, window_bounds = array<i64: 16, 128>}, {transform_indices = @transform_6, window_bounds = array<i64: 16, 256>}]} {
    %c0_i32 = arith.constant 0 : i32
    %0 = arith.cmpi eq, %arg1, %c0_i32 : i32
    %1 = arith.extui %0 : i1 to i32
    %c0_i32_0 = arith.constant 0 : i32
    %2 = arith.cmpi ne, %1, %c0_i32_0 : i32
    scf.if %2 {
      %c0_18 = arith.constant 0 : index
      %c0_19 = arith.constant 0 : index
      %20 = vector.load %arg2[%c0_18, %c0_19] : memref<16x128xf32, #tpu.memory_space<vmem>>, vector<16x128xf32>
      %c0_20 = arith.constant 0 : index
      %c0_21 = arith.constant 0 : index
      %21 = vector.load %arg6[%c0_20, %c0_21] : memref<1x128xf32, #tpu.memory_space<vmem>>, vector<1x128xf32>
      %22 = vector.broadcast %21 : vector<1x128xf32> to vector<16x128xf32>
      %23 = arith.subf %20, %22 : vector<16x128xf32>
      %c0_22 = arith.constant 0 : index
      %c0_23 = arith.constant 0 : index
      %24 = vector.load %arg9[%c0_22, %c0_23] : memref<16x128xf32, #tpu.memory_space<vmem>>, vector<16x128xf32>
      tpu.vector_store %arg9[%c0_22, %c0_23], %23 {strides = array<i32>} : memref<16x128xf32, #tpu.memory_space<vmem>>, vector<16x128xf32>,
      %cst_24 = arith.constant 0.000000e+00 : f32
      %25 = vector.broadcast %cst_24 : f32 to vector<16x128xf32>
      %c0_25 = arith.constant 0 : index
      %c0_26 = arith.constant 0 : index
      %26 = vector.load %arg10[%c0_25, %c0_26] : memref<16x128xf32, #tpu.memory_space<vmem>>, vector<16x128xf32>
      tpu.vector_store %arg10[%c0_25, %c0_26], %25 {strides = array<i32>} : memref<16x128xf32, #tpu.memory_space<vmem>>, vector<16x128xf32>,
    } else {
    }
    %c0 = arith.constant 0 : index
    %c0_1 = arith.constant 0 : index
    %3 = vector.load %arg9[%c0, %c0_1] : memref<16x128xf32, #tpu.memory_space<vmem>>, vector<16x128xf32>
    %c0_2 = arith.constant 0 : index
    %c0_3 = arith.constant 0 : index
    %4 = vector.load %arg3[%c0_2, %c0_3] : memref<128x256xf32, #tpu.memory_space<vmem>>, vector<128x256xf32>
    %cst = arith.constant dense<0.000000e+00> : vector<16x256xf32>
    %5 = tpu.matmul %3, %4, %cst {dimension_numbers = #tpu.dot_dimension_numbers<[1], [0], [0], [1], [0, 0, 1, 1], [], []>} : vector<16x128xf32>, vector<128x256xf32>, vector<16x256xf32> -> vector<16x256xf32>
    %c0_4 = arith.constant 0 : index
    %c0_5 = arith.constant 0 : index
    %6 = vector.load %arg4[%c0_4, %c0_5] : memref<1x256xf32, #tpu.memory_space<vmem>>, vector<1x256xf32>
    %7 = vector.broadcast %6 : vector<1x256xf32> to vector<16x256xf32>
    %8 = arith.addf %5, %7 : vector<16x256xf32>
    %cst_6 = arith.constant 0.000000e+00 : f32
    %9 = vector.broadcast %cst_6 : f32 to vector<16x256xf32>
    %10 = arith.maximumf %8, %9 : vector<16x256xf32>
    %c0_7 = arith.constant 0 : index
    %c0_8 = arith.constant 0 : index
    %11 = vector.load %arg8[%c0_7, %c0_8] : memref<16x256xf32, #tpu.memory_space<vmem>>, vector<16x256xf32>
    tpu.vector_store %arg8[%c0_7, %c0_8], %10 {strides = array<i32>} : memref<16x256xf32, #tpu.memory_space<vmem>>, vector<16x256xf32>,
    %c0_9 = arith.constant 0 : index
    %c0_10 = arith.constant 0 : index
    %12 = vector.load %arg10[%c0_9, %c0_10] : memref<16x128xf32, #tpu.memory_space<vmem>>, vector<16x128xf32>
    %c0_11 = arith.constant 0 : index
    %c0_12 = arith.constant 0 : index
    %13 = vector.load %arg5[%c0_11, %c0_12] : memref<256x128xf32, #tpu.memory_space<vmem>>, vector<256x128xf32>
    %cst_13 = arith.constant dense<0.000000e+00> : vector<16x128xf32>
    %14 = tpu.matmul %10, %13, %cst_13 {dimension_numbers = #tpu.dot_dimension_numbers<[1], [0], [0], [1], [0, 0, 1, 1], [], []>} : vector<16x256xf32>, vector<256x128xf32>, vector<16x128xf32> -> vector<16x128xf32>
    %15 = arith.addf %12, %14 : vector<16x128xf32>
    %c0_14 = arith.constant 0 : index
    %c0_15 = arith.constant 0 : index
    %16 = vector.load %arg10[%c0_14, %c0_15] : memref<16x128xf32, #tpu.memory_space<vmem>>, vector<16x128xf32>
    tpu.vector_store %arg10[%c0_14, %c0_15], %15 {strides = array<i32>} : memref<16x128xf32, #tpu.memory_space<vmem>>, vector<16x128xf32>,
    %c0_i32_16 = arith.constant 0 : i32
    %17 = arith.cmpi eq, %arg1, %c0_i32_16 : i32
    %18 = arith.extui %17 : i1 to i32
    %c0_i32_17 = arith.constant 0 : i32
    %19 = arith.cmpi ne, %18, %c0_i32_17 : i32
    scf.if %19 {
      %c0_18 = arith.constant 0 : index
      %c0_19 = arith.constant 0 : index
      %20 = vector.load %arg10[%c0_18, %c0_19] : memref<16x128xf32, #tpu.memory_space<vmem>>, vector<16x128xf32>
      %c0_20 = arith.constant 0 : index
      %c0_21 = arith.constant 0 : index
      %21 = vector.load %arg6[%c0_20, %c0_21] : memref<1x128xf32, #tpu.memory_space<vmem>>, vector<1x128xf32>
      %22 = vector.broadcast %21 : vector<1x128xf32> to vector<16x128xf32>
      %23 = arith.addf %20, %22 : vector<16x128xf32>
      %c0_22 = arith.constant 0 : index
      %c0_23 = arith.constant 0 : index
      %24 = vector.load %arg7[%c0_22, %c0_23] : memref<16x128xf32, #tpu.memory_space<vmem>>, vector<16x128xf32>
      tpu.vector_store %arg7[%c0_22, %c0_23], %23 {strides = array<i32>} : memref<16x128xf32, #tpu.memory_space<vmem>>, vector<16x128xf32>,
    } else {
    }
    return
  }
  func.func @transform_0(%arg0: i32, %arg1: i32) -> (i32, i32) {
    %c0_i32 = arith.constant 0 : i32
    %c0_i32_0 = arith.constant 0 : i32
    return %arg0, %c0_i32 : i32, i32
  }
  func.func @transform_1(%arg0: i32, %arg1: i32) -> (i32, i32) {
    %c0_i32 = arith.constant 0 : i32
    %c0_i32_0 = arith.constant 0 : i32
    return %c0_i32, %arg1 : i32, i32
  }
  func.func @transform_2(%arg0: i32, %arg1: i32) -> (i32, i32) {
    %c0_i32 = arith.constant 0 : i32
    %c0_i32_0 = arith.constant 0 : i32
    return %c0_i32, %arg1 : i32, i32
  }
  func.func @transform_3(%arg0: i32, %arg1: i32) -> (i32, i32) {
    %c0_i32 = arith.constant 0 : i32
    %c0_i32_0 = arith.constant 0 : i32
    return %arg1, %c0_i32 : i32, i32
  }
  func.func @transform_4(%arg0: i32, %arg1: i32) -> (i32, i32) {
    %c0_i32 = arith.constant 0 : i32
    %c0_i32_0 = arith.constant 0 : i32
    %c0_i32_1 = arith.constant 0 : i32
    return %c0_i32, %c0_i32_0 : i32, i32
  }
  func.func @transform_5(%arg0: i32, %arg1: i32) -> (i32, i32) {
    %c0_i32 = arith.constant 0 : i32
    %c0_i32_0 = arith.constant 0 : i32
    return %arg0, %c0_i32 : i32, i32
  }
  func.func @transform_6(%arg0: i32, %arg1: i32) -> (i32, i32) {
    %c0_i32 = arith.constant 0 : i32
    return %arg0, %arg1 : i32, i32
  }
}

</mosaic_0001>

<llo_original>
// kernel: _neuron_forward_impl.1
$region0: #{_neuron_forward_impl.1}
  #allocation0 [shape = 'u32[]', space=smem, size = 0x4, offset = 0x4, fixed_abs, tag = 'smem constant byte address 0x4 - core index']
  #allocation1 [shape = 'u32[72,128]{1,0:T(1,128)}', space=vmem, size = 0x9000, scoped, tag = 'internal scratch']
  #allocation2 [shape = 'f32[16,128]{1,0:T(8,128)}', space=vmem, size = 0x2000, scoped, tag = 'scratch operand']
  #allocation3 [shape = 'f32[16,128]{1,0:T(8,128)}', space=vmem, size = 0x2000, scoped, tag = 'scratch operand']
  %s0 = inlined_call_operand.vmem [shape: f32[16,128], index: 0, kind: input, shape index: {}]
  %s1 = inlined_call_operand.vmem [shape: f32[128,256], index: 1, kind: input, shape index: {}]
  %s2 = inlined_call_operand.vmem [shape: f32[1,256], index: 2, kind: input, shape index: {}]
  %s3 = inlined_call_operand.vmem [shape: f32[256,128], index: 3, kind: input, shape index: {}]
  %s4 = inlined_call_operand.vmem [shape: f32[1,128], index: 4, kind: input, shape index: {}]
  %s5 = inlined_call_operand.hbm [shape: f32[16,128], index: 5, kind: output, shape index: {0}]
  %s6 = inlined_call_operand.hbm [shape: f32[16,256], index: 6, kind: output, shape index: {1}]
  %7 = xla_tuple %s5, %s6
  %s8 = sld [smem:[#allocation0]]
  $region46: #{_neuron_forward_impl.1} parent=0
    _
  %s10 = ssub.s32 1, %s8
  %s11 = scalar_select 0, %s10, %s8
  $region1: #{_neuron_forward_impl.1} parent=0
    #allocation4 [shape = 'u8[8192]{0}', space=vmem, size = 0x2000, scoped, tag = 'output window, operand 0, single buffered']
    #allocation5 [shape = 's32[1]{0}', space=sflag, size = 0x4, scoped, tag = 'scoped memory for _neuron_forward_impl.1']
    #allocation6 [shape = 'u8[16384]{0}', space=vmem, size = 0x4000, scoped, tag = 'output window, operand 1, single buffered']
    #allocation7 [shape = 's32[1]{0}', space=sflag, size = 0x4, scoped, tag = 'scoped memory for _neuron_forward_impl.1']
    %12 = vsyncpa [#allocation5], 0
    %13 = vsyncpa [#allocation7], 0
    // Predicated region
    $region2: #{_neuron_forward_impl.1} parent=1 // pred_check
      _
    $region3: #{_neuron_forward_impl.1} parent=1 // pred_check_branch
      %15 = sbr.rel (0) target = $region5
    $region4: #{_neuron_forward_impl.1} parent=1 // pred_region
      _
    $region5: #{_neuron_forward_impl.1} parent=1 // pred_fallthru
      _
    // Predicated region
    $region6: #{_neuron_forward_impl.1} parent=1 // pred_check
      _
    $region7: #{_neuron_forward_impl.1} parent=1 // pred_check_branch
      %17 = sbr.rel (0) target = $region9
    $region8: #{_neuron_forward_impl.1} parent=1 // pred_region
      _
    $region9: #{_neuron_forward_impl.1} parent=1 // pred_fallthru
      _
    // Predicated region
    $region10: #{_neuron_forward_impl.1} parent=1 // pred_check
      _
    $region11: #{_neuron_forward_impl.1} parent=1 // pred_check_branch
      %19 = sbr.rel (0) target = $region13
    $region12: #{_neuron_forward_impl.1} parent=1 // pred_region
      _
    $region13: #{_neuron_forward_impl.1} parent=1 // pred_fallthru
      _
    // Predicated region
    $region14: #{_neuron_forward_impl.1} parent=1 // pred_check
      _
    $region15: #{_neuron_forward_impl.1} parent=1 // pred_check_branch
      %21 = sbr.rel (0) target = $region17
    $region16: #{_neuron_forward_impl.1} parent=1 // pred_region
      _
    $region17: #{_neuron_forward_impl.1} parent=1 // pred_fallthru
      _
    // Predicated region
    $region18: #{_neuron_forward_impl.1} parent=1 // pred_check
      _
    $region19: #{_neuron_forward_impl.1} parent=1 // pred_check_branch
      %23 = sbr.rel (0) target = $region21
    $region20: #{_neuron_forward_impl.1} parent=1 // pred_region
      _
    $region21: #{_neuron_forward_impl.1} parent=1 // pred_fallthru
      _
    %p24 = scmp.eq.s32.totalorder 0, 0
    // Predicated region
    $region22: #{_neuron_forward_impl.1} parent=1 // pred_check
      %p25 = pneg %p24
    $region23: #{_neuron_forward_impl.1} parent=1 // pred_check_branch
      %27 = sbr.rel (%p25) target = $region25
    $region24: #{_neuron_forward_impl.1} parent=1 // pred_region
      %v28 = vld [vmem:[%s0] sm:$0xff]
      %v29 = vld [vmem:[%s0 + $0x8] sm:$0xff]
      %v30 = vld [vmem:[%s4] sm:$0x1]
      %v32 = vperm.slane %v30, 0
      %v34 = vsub.f32 %v28, %v32
      %v35 = vsub.f32 %v29, %v32
      %36 = vst [vmem:[#allocation2] sm:$0xff] %v34
      %37 = vst [vmem:[#allocation2 + $0x8] sm:$0xff] %v35
      %38 = vst [vmem:[#allocation3] sm:$0xff] 0.0
      %39 = vst [vmem:[#allocation3 + $0x8] sm:$0xff] 0.0
    $region25: #{_neuron_forward_impl.1} parent=1 // pred_fallthru
      _
    %v40 = vld [vmem:[#allocation2] sm:$0xff]
    %v41 = vld [vmem:[#allocation2 + $0x8] sm:$0xff]
    %v42 = vld [vmem:[%s1] sm:$0xff]
    %v43 = vld [vmem:[%s1 + $0x8] sm:$0xff]
    %v44 = vld [vmem:[%s1 + $0x10] sm:$0xff]
    %v45 = vld [vmem:[%s1 + $0x18] sm:$0xff]
    %v46 = vld [vmem:[%s1 + $0x20] sm:$0xff]
    %v47 = vld [vmem:[%s1 + $0x28] sm:$0xff]
    %v48 = vld [vmem:[%s1 + $0x30] sm:$0xff]
    %v49 = vld [vmem:[%s1 + $0x38] sm:$0xff]
    %v50 = vld [vmem:[%s1 + $0x40] sm:$0xff]
    %v51 = vld [vmem:[%s1 + $0x48] sm:$0xff]
    %v52 = vld [vmem:[%s1 + $0x50] sm:$0xff]
    %v53 = vld [vmem:[%s1 + $0x58] sm:$0xff]
    %v54 = vld [vmem:[%s1 + $0x60] sm:$0xff]
    %v55 = vld [vmem:[%s1 + $0x68] sm:$0xff]
    %v56 = vld [vmem:[%s1 + $0x70] sm:$0xff]
    %v57 = vld [vmem:[%s1 + $0x78] sm:$0xff]
    %v58 = vld [vmem:[%s1 + $0x80] sm:$0xff]
    %v59 = vld [vmem:[%s1 + $0x88] sm:$0xff]
    %v60 = vld [vmem:[%s1 + $0x90] sm:$0xff]
    %v61 = vld [vmem:[%s1 + $0x98] sm:$0xff]
    %v62 = vld [vmem:[%s1 + $0xa0] sm:$0xff]
    %v63 = vld [vmem:[%s1 + $0xa8] sm:$0xff]
    %v64 = vld [vmem:[%s1 + $0xb0] sm:$0xff]
    %v65 = vld [vmem:[%s1 + $0xb8] sm:$0xff]
    %v66 = vld [vmem:[%s1 + $0xc0] sm:$0xff]
    %v67 = vld [vmem:[%s1 + $0xc8] sm:$0xff]
    %v68 = vld [vmem:[%s1 + $0xd0] sm:$0xff]
    %v69 = vld [vmem:[%s1 + $0xd8] sm:$0xff]
    %v70 = vld [vmem:[%s1 + $0xe0] sm:$0xff]
    %v71 = vld [vmem:[%s1 + $0xe8] sm:$0xff]
    %v72 = vld [vmem:[%s1 + $0xf0] sm:$0xff]
    %v73 = vld [vmem:[%s1 + $0xf8] sm:$0xff]
    %v74 = vld [vmem:[%s2] sm:$0x3]
    %v76 = vperm.slane %v74, 0
    %v77 = vperm.slane %v74, 1
    %80 = vmatpush.msra.mxu0 %v72
    %81 = vmatpush.msra.mxu0 %v70
    %82 = vmatpush.msra.mxu0 %v68
    %83 = vmatpush.msra.mxu0 %v66
    %84 = vmatpush.msra.mxu0 %v64
    %85 = vmatpush.msra.mxu0 %v62
    %86 = vmatpush.msra.mxu0 %v60
    %87 = vmatpush.msra.mxu0 %v58
    %88 = vmatpush.msra.mxu0 %v56
    %89 = vmatpush.msra.mxu0 %v54
    %90 = vmatpush.msra.mxu0 %v52
    %91 = vmatpush.msra.mxu0 %v50
    %92 = vmatpush.msra.mxu0 %v48
    %93 = vmatpush.msra.mxu0 %v46
    %94 = vmatpush.msra.mxu0 %v44
    %95 = vmatpush.msra.mxu0 %v42
    %96 = vmatmul.f32.gmra.mxu0 %v40
    %v97 = vpop.f32.mrf.mxu0
    %v98 = vadd.f32 %v76, %v97
    %99 = vmatmul.f32.gmra.mxu0 %v41
    %v100 = vpop.f32.mrf.mxu0
    %v101 = vadd.f32 %v76, %v100
    %102 = vdwg.mxu0
    %103 = vmatpush.msra.mxu0 %v73
    %104 = vmatpush.msra.mxu0 %v71
    %105 = vmatpush.msra.mxu0 %v69
    %106 = vmatpush.msra.mxu0 %v67
    %107 = vmatpush.msra.mxu0 %v65
    %108 = vmatpush.msra.mxu0 %v63
    %109 = vmatpush.msra.mxu0 %v61
    %110 = vmatpush.msra.mxu0 %v59
    %111 = vmatpush.msra.mxu0 %v57
    %112 = vmatpush.msra.mxu0 %v55
    %113 = vmatpush.msra.mxu0 %v53
    %114 = vmatpush.msra.mxu0 %v51
    %115 = vmatpush.msra.mxu0 %v49
    %116 = vmatpush.msra.mxu0 %v47
    %117 = vmatpush.msra.mxu0 %v45
    %118 = vmatpush.msra.mxu0 %v43
    %119 = vmatmul.f32.gmra.mxu0 %v40
    %v120 = vpop.f32.mrf.mxu0
    %v121 = vadd.f32 %v77, %v120
    %122 = vmatmul.f32.gmra.mxu0 %v41
    %v123 = vpop.f32.mrf.mxu0
    %v124 = vadd.f32 %v77, %v123
    %125 = vdwg.mxu0
    %v126 = vmax.f32 %v98, 0.0
    %v127 = vmax.f32 %v121, 0.0
    %v128 = vmax.f32 %v101, 0.0
    %v129 = vmax.f32 %v124, 0.0
    %130 = vst [vmem:[#allocation6] sm:$0xff] %v126
    %131 = vst [vmem:[#allocation6 + $0x8] sm:$0xff] %v127
    %132 = vst [vmem:[#allocation6 + $0x10] sm:$0xff] %v128
    %133 = vst [vmem:[#allocation6 + $0x18] sm:$0xff] %v129
    %v134 = vld [vmem:[#allocation3] sm:$0xff]
    %v135 = vld [vmem:[#allocation3 + $0x8] sm:$0xff]
    %v136 = vld [vmem:[%s3] sm:$0xff]
    %v137 = vld [vmem:[%s3 + $0x8] sm:$0xff]
    %v138 = vld [vmem:[%s3 + $0x10] sm:$0xff]
    %v139 = vld [vmem:[%s3 + $0x18] sm:$0xff]
    %v140 = vld [vmem:[%s3 + $0x20] sm:$0xff]
    %v141 = vld [vmem:[%s3 + $0x28] sm:$0xff]
    %v142 = vld [vmem:[%s3 + $0x30] sm:$0xff]
    %v143 = vld [vmem:[%s3 + $0x38] sm:$0xff]
    %v144 = vld [vmem:[%s3 + $0x40] sm:$0xff]
    %v145 = vld [vmem:[%s3 + $0x48] sm:$0xff]
    %v146 = vld [vmem:[%s3 + $0x50] sm:$0xff]
    %v147 = vld [vmem:[%s3 + $0x58] sm:$0xff]
    %v148 = vld [vmem:[%s3 + $0x60] sm:$0xff]
    %v149 = vld [vmem:[%s3 + $0x68] sm:$0xff]
    %v150 = vld [vmem:[%s3 + $0x70] sm:$0xff]
    %v151 = vld [vmem:[%s3 + $0x78] sm:$0xff]
    %v152 = vld [vmem:[%s3 + $0x80] sm:$0xff]
    %v153 = vld [vmem:[%s3 + $0x88] sm:$0xff]
    %v154 = vld [vmem:[%s3 + $0x90] sm:$0xff]
    %v155 = vld [vmem:[%s3 + $0x98] sm:$0xff]
    %v156 = vld [vmem:[%s3 + $0xa0] sm:$0xff]
    %v157 = vld [vmem:[%s3 + $0xa8] sm:$0xff]
    %v158 = vld [vmem:[%s3 + $0xb0] sm:$0xff]
    %v159 = vld [vmem:[%s3 + $0xb8] sm:$0xff]
    %v160 = vld [vmem:[%s3 + $0xc0] sm:$0xff]
    %v161 = vld [vmem:[%s3 + $0xc8] sm:$0xff]
    %v162 = vld [vmem:[%s3 + $0xd0] sm:$0xff]
    %v163 = vld [vmem:[%s3 + $0xd8] sm:$0xff]
    %v164 = vld [vmem:[%s3 + $0xe0] sm:$0xff]
    %v165 = vld [vmem:[%s3 + $0xe8] sm:$0xff]
    %v166 = vld [vmem:[%s3 + $0xf0] sm:$0xff]
    %v167 = vld [vmem:[%s3 + $0xf8] sm:$0xff]
    %168 = vmatpush.msra.mxu0 %v151
    %169 = vmatpush.msra.mxu0 %v150
    %170 = vmatpush.msra.mxu0 %v149
    %171 = vmatpush.msra.mxu0 %v148
    %172 = vmatpush.msra.mxu0 %v147
    %173 = vmatpush.msra.mxu0 %v146
    %174 = vmatpush.msra.mxu0 %v145
    %175 = vmatpush.msra.mxu0 %v144
    %176 = vmatpush.msra.mxu0 %v143
    %177 = vmatpush.msra.mxu0 %v142
    %178 = vmatpush.msra.mxu0 %v141
    %179 = vmatpush.msra.mxu0 %v140
    %180 = vmatpush.msra.mxu0 %v139
    %181 = vmatpush.msra.mxu0 %v138
    %182 = vmatpush.msra.mxu0 %v137
    %183 = vmatpush.msra.mxu0 %v136
    %184 = vmatmul.f32.gmra.mxu0 %v126
    %v185 = vpop.f32.mrf.mxu0
    %v186 = vadd.f32 0.0, %v185
    %187 = vmatmul.f32.gmra.mxu0 %v128
    %v188 = vpop.f32.mrf.mxu0
    %v189 = vadd.f32 0.0, %v188
    %190 = vdwg.mxu0
    %191 = vmatpush.msra.mxu0 %v167
    %192 = vmatpush.msra.mxu0 %v166
    %193 = vmatpush.msra.mxu0 %v165
    %194 = vmatpush.msra.mxu0 %v164
    %195 = vmatpush.msra.mxu0 %v163
    %196 = vmatpush.msra.mxu0 %v162
    %197 = vmatpush.msra.mxu0 %v161
    %198 = vmatpush.msra.mxu0 %v160
    %199 = vmatpush.msra.mxu0 %v159
    %200 = vmatpush.msra.mxu0 %v158
    %201 = vmatpush.msra.mxu0 %v157
    %202 = vmatpush.msra.mxu0 %v156
    %203 = vmatpush.msra.mxu0 %v155
    %204 = vmatpush.msra.mxu0 %v154
    %205 = vmatpush.msra.mxu0 %v153
    %206 = vmatpush.msra.mxu0 %v152
    %207 = vmatmul.f32.gmra.mxu0 %v127
    %v208 = vpop.f32.mrf.mxu0
    %v209 = vadd.f32 %v186, %v208
    %210 = vmatmul.f32.gmra.mxu0 %v129
    %v211 = vpop.f32.mrf.mxu0
    %v212 = vadd.f32 %v189, %v211
    %213 = vdwg.mxu0
    %v214 = vadd.f32 %v134, %v209
    %v215 = vadd.f32 %v135, %v212
    %216 = vst [vmem:[#allocation3] sm:$0xff] %v214
    %217 = vst [vmem:[#allocation3 + $0x8] sm:$0xff] %v215
    // Predicated region
    $region26: #{_neuron_forward_impl.1} parent=1 // pred_check
      %p218 = pneg %p24
    $region27: #{_neuron_forward_impl.1} parent=1 // pred_check_branch
      %220 = sbr.rel (%p218) target = $region29
    $region28: #{_neuron_forward_impl.1} parent=1 // pred_region
      %v221 = vld [vmem:[#allocation3] sm:$0xff]
      %v222 = vld [vmem:[#allocation3 + $0x8] sm:$0xff]
      %v223 = vld [vmem:[%s4] sm:$0x1]
      %v225 = vperm.slane %v223, 0
      %v227 = vadd.f32 %v221, %v225
      %v228 = vadd.f32 %v222, %v225
      %229 = vst [vmem:[#allocation4] sm:$0xff] %v227
      %230 = vst [vmem:[#allocation4 + $0x8] sm:$0xff] %v228
    $region29: #{_neuron_forward_impl.1} parent=1 // pred_fallthru
      _
    // Predicated region
    $region30: #{_neuron_forward_impl.1} parent=1 // pred_check
      _
    $region31: #{_neuron_forward_impl.1} parent=1 // pred_check_branch
      %232 = sbr.rel (0) target = $region33
    $region32: #{_neuron_forward_impl.1} parent=1 // pred_region
      %234 = vsyncadd [#allocation5], 0
      %s235 = sshll.u32 [#allocation4], 4
      %s236 = int_to_ptr.vmem [resolvable:$true] %s235
      %s237 = sshll.u32 %s5, 4
      %s238 = int_to_ptr.hbm [resolvable:$true] %s237
      %243 = dma.vmem_to_hbm [thread:$0]  %s236, 256, %s238, [#allocation5], 128, 128, 8
    $region33: #{_neuron_forward_impl.1} parent=1 // pred_fallthru
      _
    // Predicated region
    $region34: #{_neuron_forward_impl.1} parent=1 // pred_check
      _
    $region35: #{_neuron_forward_impl.1} parent=1 // pred_check_branch
      %245 = sbr.rel (0) target = $region37
    $region36: #{_neuron_forward_impl.1} parent=1 // pred_region
      %247 = vsyncadd [#allocation7], 0
      %s248 = sshll.u32 [#allocation6], 4
      %s249 = int_to_ptr.vmem [resolvable:$true] %s248
      %s250 = sshll.u32 %s6, 4
      %s251 = int_to_ptr.hbm [resolvable:$true] %s250
      %256 = dma.vmem_to_hbm [thread:$0]  %s249, 512, %s251, [#allocation7], 256, 256, 16
    $region37: #{_neuron_forward_impl.1} parent=1 // pred_fallthru
      _
    // Predicated region
    $region38: #{_neuron_forward_impl.1} parent=1 // pred_check
      _
    $region39: #{_neuron_forward_impl.1} parent=1 // pred_check_branch
      %258 = sbr.rel (0) target = $region41
    $region40: #{_neuron_forward_impl.1} parent=1 // pred_region
      %260 = dma.done [#allocation5], 256
    $region41: #{_neuron_forward_impl.1} parent=1 // pred_fallthru
      _
    // Predicated region
    $region42: #{_neuron_forward_impl.1} parent=1 // pred_check
      _
    $region43: #{_neuron_forward_impl.1} parent=1 // pred_check_branch
      %262 = sbr.rel (0) target = $region45
    $region44: #{_neuron_forward_impl.1} parent=1 // pred_region
      %264 = dma.done [#allocation7], 512
    $region45: #{_neuron_forward_impl.1} parent=1 // pred_fallthru
      _
    %265 = vsyncpa [#allocation5], 1
    %266 = vsyncpa [#allocation7], 1

</llo_original>
